<compile_context>
chip_gen: v5e
topology: v5e:2x2
jax: 0.10.0
libtpu: 0.0.40
codegen_flags: <defaults>
</compile_context>

<pallas_src>
import jax
import jax.numpy as jnp
from jax import lax
from jax.experimental import pallas as pl
from jax.experimental.pallas import tpu as pltpu

LANE = 128  # TPU lane width


def _round_up(n, m):
    return ((n + m - 1) // m) * m


def mlp_kernel(x_ref,
               w1_ref, b1_ref,
               w2_ref, b2_ref,
               w3_ref, b3_ref,
               w4t_ref, b4r_ref,
               o_ref):
    """Fused MLP on one batch tile.

    x_ref: (bb, d) in the module's native layout.  Internal activations are
    (features, bb) -- batch on lanes -- so bias adds / ReLUs are lane-dense;
    the layout change is absorbed by the first and last MXU contractions.
    """
    x = x_ref[...]                                              # (bb, d)

    # Layer 1: h = W1 @ x^T  -> (width_1, bb)   (contract feature dim of both)
    h = lax.dot_general(w1_ref[...], x, (((1,), (1,)), ((), ())),
                        preferred_element_type=jnp.float32)
    h = jnp.maximum(h + b1_ref[...], 0.0)

    # Layers 2 & 3: standard (out, in) @ (in, bb) matmuls, batch on lanes.
    h = jnp.maximum(
        jnp.dot(w2_ref[...], h, preferred_element_type=jnp.float32)
        + b2_ref[...], 0.0)
    h = jnp.maximum(
        jnp.dot(w3_ref[...], h, preferred_element_type=jnp.float32)
        + b3_ref[...], 0.0)

    # Layer 4: y = h^T @ W4^T -> (bb, out_dim); output block is already in the
    # module's (batch, out_dim) layout, so no wrapper-side transpose is needed.
    y = lax.dot_general(h, w4t_ref[...], (((0,), (0,)), ((), ())),
                        preferred_element_type=jnp.float32)
    o_ref[...] = (y + b4r_ref[...]).astype(o_ref.dtype)


def dyn_model_net_relu3(x, params, *, block_b=4096, min_grid_steps=4):
    """Forward pass of DynModelNetRelu3.

    x: (B, d) float32.
    params: w1..w4 in PyTorch layout (out, in); b1..b4 as (out,).
    """
    B, d = x.shape
    w1, b1 = params["w1"], params["b1"]
    w2, b2 = params["w2"], params["b2"]
    w3, b3 = params["w3"], params["b3"]
    w4, b4 = params["w4"], params["b4"]
    out_dim = w4.shape[0]

    # One-time, tiny parameter reshapes (<= a few hundred bytes; NOT per-row
    # activation traffic): biases as broadcastable columns/row, W4 as (in, out).
    b1c = b1.reshape(w1.shape[0], 1)
    b2c = b2.reshape(w2.shape[0], 1)
    b3c = b3.reshape(w3.shape[0], 1)
    w4t = w4.T                       # (width_2, out_dim)
    b4r = b4.reshape(1, out_dim)

    # Batch tile: large (amortize ~0.35us/step overhead), lane-aligned, capped
    # so big batches still give >= min_grid_steps steps (v7x has 2 TensorCores),
    # and never larger than the batch itself (no padding; Pallas handles the
    # ragged trailing block, rows are independent).
    bb = _round_up(max(block_b, LANE), LANE)
    bb = min(bb, max(LANE, _round_up(pl.cdiv(B, min_grid_steps), LANE)))
    if B <= bb:
        bb = B                        # single block whose dims equal the array
    grid = (pl.cdiv(B, bb),)

    def rep_spec(a):
        # Grid-invariant full-array block (weights / biases fetched once).
        return pl.BlockSpec(a.shape, lambda i: (0, 0))

    # Advisory cost estimate for the XLA scheduler.
    flops = 2 * B * (d * w1.shape[0]
                     + w1.shape[0] * w2.shape[0]
                     + w2.shape[0] * w3.shape[0]
                     + w3.shape[0] * out_dim)
    weight_bytes = sum(int(a.size) * a.dtype.itemsize
                       for a in (w1, b1, w2, b2, w3, b3, w4, b4))
    bytes_accessed = int(x.dtype.itemsize) * B * (d + out_dim) + weight_bytes

    return pl.pallas_call(
        mlp_kernel,
        out_shape=jax.ShapeDtypeStruct((B, out_dim), x.dtype),
        grid_spec=pltpu.PrefetchScalarGridSpec(
            num_scalar_prefetch=0,
            grid=grid,
            in_specs=[
                pl.BlockSpec((bb, d), lambda i: (i, 0)),     # native-layout x tile
                rep_spec(w1), rep_spec(b1c),
                rep_spec(w2), rep_spec(b2c),
                rep_spec(w3), rep_spec(b3c),
                rep_spec(w4t), rep_spec(b4r),
            ],
            out_specs=pl.BlockSpec((bb, out_dim), lambda i: (i, 0)),
        ),
        compiler_params=pltpu.CompilerParams(
            dimension_semantics=("parallel",),
            vmem_limit_bytes=48 * 1024 * 1024),
        cost_estimate=pl.CostEstimate(
            flops=flops, transcendentals=0, bytes_accessed=bytes_accessed),
    )(x, w1, b1c, w2, b2c, w3, b3c, w4t, b4r)


def init_params(key, d, width_1, width_2, out_dim, dtype=jnp.float32):
    """nn.Linear-style init; weights (out, in), biases (out,) -- PyTorch layout."""
    ks = jax.random.split(key, 8)

    def linear(kw, kb, fan_in, fan_out):
        bound = 1.0 / (fan_in ** 0.5)
        w = jax.random.uniform(kw, (fan_out, fan_in), dtype, -bound, bound)
        b = jax.random.uniform(kb, (fan_out,), dtype, -bound, bound)
        return w, b

    w1, b1 = linear(ks[0], ks[1], d, width_1)
    w2, b2 = linear(ks[2], ks[3], width_1, width_2)
    w3, b3 = linear(ks[4], ks[5], width_2, width_2)
    w4, b4 = linear(ks[6], ks[7], width_2, out_dim)
    return dict(w1=w1, b1=b1, w2=w2, b2=b2, w3=w3, b3=b3, w4=w4, b4=b4)


def reference_forward(x, p):
    h = jnp.maximum(x @ p["w1"].T + p["b1"], 0.0)
    h = jnp.maximum(h @ p["w2"].T + p["b2"], 0.0)
    h = jnp.maximum(h @ p["w3"].T + p["b3"], 0.0)
    return h @ p["w4"].T + p["b4"]


if __name__ == "__main__":
    key = jax.random.PRNGKey(0)
    k_x, k_p = jax.random.split(key)

    # Small shapes consistent with the module: batch=8, d=4, widths=32, out=4.
    B, d, width_1, width_2, out_dim = 8, 4, 32, 32, 4

    x = jax.random.normal(k_x, (B, d), jnp.float32)
    params = init_params(k_p, d, width_1, width_2, out_dim)

    out = jax.block_until_ready(dyn_model_net_relu3(x, params))
    ref = reference_forward(x, params)
    assert out.shape == (B, out_dim)
    assert jnp.allclose(out, ref, atol=1e-5, rtol=1e-5), "mismatch vs reference"

    # Ragged multi-step grid (300 rows, 128-row tiles -> 3 steps, masked tail).
    B2 = 300
    x2 = jax.random.normal(jax.random.PRNGKey(1), (B2, d), jnp.float32)
    out2 = jax.block_until_ready(dyn_model_net_relu3(x2, params, block_b=128))
    ref2 = reference_forward(x2, params)
    assert out2.shape == (B2, out_dim)
    assert jnp.allclose(out2, ref2, atol=1e-5, rtol=1e-5), "mismatch (ragged batch)"

    # Larger batch with default tiling: exercises the >=4-grid-step cap + ragged tail.
    B3 = 5000
    x3 = jax.random.normal(jax.random.PRNGKey(2), (B3, d), jnp.float32)
    out3 = jax.block_until_ready(dyn_model_net_relu3(x3, params))
    ref3 = reference_forward(x3, params)
    assert out3.shape == (B3, out_dim)
    assert jnp.allclose(out3, ref3, atol=1e-5, rtol=1e-5), "mismatch (large batch)"

    print("KERNEL_OK")
</pallas_src>

<mosaic_0001>
module attributes {stable_mosaic.version = 11 : i64} {
  func.func @mlp_kernel(%arg0: i32, %arg1: memref<8x4xf32, #tpu.memory_space<vmem>>, %arg2: memref<32x4xf32, #tpu.memory_space<vmem>>, %arg3: memref<32x1xf32, #tpu.memory_space<vmem>>, %arg4: memref<32x32xf32, #tpu.memory_space<vmem>>, %arg5: memref<32x1xf32, #tpu.memory_space<vmem>>, %arg6: memref<32x32xf32, #tpu.memory_space<vmem>>, %arg7: memref<32x1xf32, #tpu.memory_space<vmem>>, %arg8: memref<32x4xf32, #tpu.memory_space<vmem>>, %arg9: memref<1x4xf32, #tpu.memory_space<vmem>>, %arg10: memref<8x4xf32, #tpu.memory_space<vmem>>) attributes {dimension_semantics = [#tpu.dimension_semantics<parallel>], iteration_bounds = array<i64: 1>, scalar_prefetch = 0 : i64, scratch_operands = 0 : i64, tpu.core_type = #tpu.core_type<tc>, window_params = [{transform_indices = @transform_0, window_bounds = array<i64: 8, 4>}, {pipeline_mode = #tpu.pipeline_mode<synchronous>, transform_indices = @transform_1, window_bounds = array<i64: 32, 4>}, {pipeline_mode = #tpu.pipeline_mode<synchronous>, transform_indices = @transform_2, window_bounds = array<i64: 32, 1>}, {pipeline_mode = #tpu.pipeline_mode<synchronous>, transform_indices = @transform_3, window_bounds = array<i64: 32, 32>}, {pipeline_mode = #tpu.pipeline_mode<synchronous>, transform_indices = @transform_4, window_bounds = array<i64: 32, 1>}, {pipeline_mode = #tpu.pipeline_mode<synchronous>, transform_indices = @transform_5, window_bounds = array<i64: 32, 32>}, {pipeline_mode = #tpu.pipeline_mode<synchronous>, transform_indices = @transform_6, window_bounds = array<i64: 32, 1>}, {pipeline_mode = #tpu.pipeline_mode<synchronous>, transform_indices = @transform_7, window_bounds = array<i64: 32, 4>}, {pipeline_mode = #tpu.pipeline_mode<synchronous>, transform_indices = @transform_8, window_bounds = array<i64: 1, 4>}, {transform_indices = @transform_9, window_bounds = array<i64: 8, 4>}]} {
    %c0 = arith.constant 0 : index
    %c0_0 = arith.constant 0 : index
    %0 = vector.load %arg1[%c0, %c0_0] : memref<8x4xf32, #tpu.memory_space<vmem>>, vector<8x4xf32>
    %c0_1 = arith.constant 0 : index
    %c0_2 = arith.constant 0 : index
    %1 = vector.load %arg2[%c0_1, %c0_2] : memref<32x4xf32, #tpu.memory_space<vmem>>, vector<32x4xf32>
    %cst = arith.constant dense<0.000000e+00> : vector<32x8xf32>
    %2 = tpu.matmul %1, %0, %cst {dimension_numbers = #tpu.dot_dimension_numbers<[1], [1], [0], [0], [0, 0, 1, 0], [], []>} : vector<32x4xf32>, vector<8x4xf32>, vector<32x8xf32> -> vector<32x8xf32>
    %c0_3 = arith.constant 0 : index
    %c0_4 = arith.constant 0 : index
    %3 = vector.load %arg3[%c0_3, %c0_4] : memref<32x1xf32, #tpu.memory_space<vmem>>, vector<32x1xf32>
    %4 = vector.broadcast %3 : vector<32x1xf32> to vector<32x8xf32>
    %5 = arith.addf %2, %4 : vector<32x8xf32>
    %cst_5 = arith.constant 0.000000e+00 : f32
    %6 = vector.broadcast %cst_5 : f32 to vector<32x8xf32>
    %7 = arith.maximumf %5, %6 : vector<32x8xf32>
    %c0_6 = arith.constant 0 : index
    %c0_7 = arith.constant 0 : index
    %8 = vector.load %arg4[%c0_6, %c0_7] : memref<32x32xf32, #tpu.memory_space<vmem>>, vector<32x32xf32>
    %cst_8 = arith.constant dense<0.000000e+00> : vector<32x8xf32>
    %9 = tpu.matmul %8, %7, %cst_8 {dimension_numbers = #tpu.dot_dimension_numbers<[1], [0], [0], [1], [0, 0, 1, 1], [], []>} : vector<32x32xf32>, vector<32x8xf32>, vector<32x8xf32> -> vector<32x8xf32>
    %c0_9 = arith.constant 0 : index
    %c0_10 = arith.constant 0 : index
    %10 = vector.load %arg5[%c0_9, %c0_10] : memref<32x1xf32, #tpu.memory_space<vmem>>, vector<32x1xf32>
    %11 = vector.broadcast %10 : vector<32x1xf32> to vector<32x8xf32>
    %12 = arith.addf %9, %11 : vector<32x8xf32>
    %cst_11 = arith.constant 0.000000e+00 : f32
    %13 = vector.broadcast %cst_11 : f32 to vector<32x8xf32>
    %14 = arith.maximumf %12, %13 : vector<32x8xf32>
    %c0_12 = arith.constant 0 : index
    %c0_13 = arith.constant 0 : index
    %15 = vector.load %arg6[%c0_12, %c0_13] : memref<32x32xf32, #tpu.memory_space<vmem>>, vector<32x32xf32>
    %cst_14 = arith.constant dense<0.000000e+00> : vector<32x8xf32>
    %16 = tpu.matmul %15, %14, %cst_14 {dimension_numbers = #tpu.dot_dimension_numbers<[1], [0], [0], [1], [0, 0, 1, 1], [], []>} : vector<32x32xf32>, vector<32x8xf32>, vector<32x8xf32> -> vector<32x8xf32>
    %c0_15 = arith.constant 0 : index
    %c0_16 = arith.constant 0 : index
    %17 = vector.load %arg7[%c0_15, %c0_16] : memref<32x1xf32, #tpu.memory_space<vmem>>, vector<32x1xf32>
    %18 = vector.broadcast %17 : vector<32x1xf32> to vector<32x8xf32>
    %19 = arith.addf %16, %18 : vector<32x8xf32>
    %cst_17 = arith.constant 0.000000e+00 : f32
    %20 = vector.broadcast %cst_17 : f32 to vector<32x8xf32>
    %21 = arith.maximumf %19, %20 : vector<32x8xf32>
    %c0_18 = arith.constant 0 : index
    %c0_19 = arith.constant 0 : index
    %22 = vector.load %arg8[%c0_18, %c0_19] : memref<32x4xf32, #tpu.memory_space<vmem>>, vector<32x4xf32>
    %cst_20 = arith.constant dense<0.000000e+00> : vector<8x4xf32>
    %23 = tpu.matmul %21, %22, %cst_20 {dimension_numbers = #tpu.dot_dimension_numbers<[0], [0], [1], [1], [0, 1, 1, 1], [], []>} : vector<32x8xf32>, vector<32x4xf32>, vector<8x4xf32> -> vector<8x4xf32>
    %c0_21 = arith.constant 0 : index
    %c0_22 = arith.constant 0 : index
    %24 = vector.load %arg9[%c0_21, %c0_22] : memref<1x4xf32, #tpu.memory_space<vmem>>, vector<1x4xf32>
    %25 = vector.broadcast %24 : vector<1x4xf32> to vector<8x4xf32>
    %26 = arith.addf %23, %25 : vector<8x4xf32>
    %c0_23 = arith.constant 0 : index
    %c0_24 = arith.constant 0 : index
    %27 = vector.load %arg10[%c0_23, %c0_24] : memref<8x4xf32, #tpu.memory_space<vmem>>, vector<8x4xf32>
    tpu.vector_store %arg10[%c0_23, %c0_24], %26 {strides = array<i32>} : memref<8x4xf32, #tpu.memory_space<vmem>>, vector<8x4xf32>,
    return
  }
  func.func @transform_0(%arg0: i32) -> (i32, i32) {
    %c0_i32 = arith.constant 0 : i32
    %c0_i32_0 = arith.constant 0 : i32
    return %arg0, %c0_i32 : i32, i32
  }
  func.func @transform_1(%arg0: i32) -> (i32, i32) {
    %c0_i32 = arith.constant 0 : i32
    %c0_i32_0 = arith.constant 0 : i32
    %c0_i32_1 = arith.constant 0 : i32
    return %c0_i32, %c0_i32_0 : i32, i32
  }
  func.func @transform_2(%arg0: i32) -> (i32, i32) {
    %c0_i32 = arith.constant 0 : i32
    %c0_i32_0 = arith.constant 0 : i32
    %c0_i32_1 = arith.constant 0 : i32
    return %c0_i32, %c0_i32_0 : i32, i32
  }
  func.func @transform_3(%arg0: i32) -> (i32, i32) {
    %c0_i32 = arith.constant 0 : i32
    %c0_i32_0 = arith.constant 0 : i32
    %c0_i32_1 = arith.constant 0 : i32
    return %c0_i32, %c0_i32_0 : i32, i32
  }
  func.func @transform_4(%arg0: i32) -> (i32, i32) {
    %c0_i32 = arith.constant 0 : i32
    %c0_i32_0 = arith.constant 0 : i32
    %c0_i32_1 = arith.constant 0 : i32
    return %c0_i32, %c0_i32_0 : i32, i32
  }
  func.func @transform_5(%arg0: i32) -> (i32, i32) {
    %c0_i32 = arith.constant 0 : i32
    %c0_i32_0 = arith.constant 0 : i32
    %c0_i32_1 = arith.constant 0 : i32
    return %c0_i32, %c0_i32_0 : i32, i32
  }
  func.func @transform_6(%arg0: i32) -> (i32, i32) {
    %c0_i32 = arith.constant 0 : i32
    %c0_i32_0 = arith.constant 0 : i32
    %c0_i32_1 = arith.constant 0 : i32
    return %c0_i32, %c0_i32_0 : i32, i32
  }
  func.func @transform_7(%arg0: i32) -> (i32, i32) {
    %c0_i32 = arith.constant 0 : i32
    %c0_i32_0 = arith.constant 0 : i32
    %c0_i32_1 = arith.constant 0 : i32
    return %c0_i32, %c0_i32_0 : i32, i32
  }
  func.func @transform_8(%arg0: i32) -> (i32, i32) {
    %c0_i32 = arith.constant 0 : i32
    %c0_i32_0 = arith.constant 0 : i32
    %c0_i32_1 = arith.constant 0 : i32
    return %c0_i32, %c0_i32_0 : i32, i32
  }
  func.func @transform_9(%arg0: i32) -> (i32, i32) {
    %c0_i32 = arith.constant 0 : i32
    %c0_i32_0 = arith.constant 0 : i32
    return %arg0, %c0_i32 : i32, i32
  }
}

</mosaic_0001>

<llo_original>
// kernel: tpu_custom_call.1
$region0: #{tpu_custom_call.1}
  #allocation0 [shape = 'u32[]', space=smem, size = 0x4, offset = 0x4, fixed_abs, tag = 'smem constant byte address 0x4 - core index']
  #allocation1 [shape = 'u32[72,128]{1,0:T(1,128)}', space=vmem, size = 0x9000, scoped, tag = 'internal scratch']
  %s0 = inlined_call_operand.vmem [shape: f32[8,4], index: 0, kind: input, shape index: {}]
  %s1 = inlined_call_operand.vmem [shape: f32[32,4], index: 1, kind: input, shape index: {}]
  %s2 = inlined_call_operand.vmem [shape: f32[32,1], index: 2, kind: input, shape index: {}]
  %s3 = inlined_call_operand.vmem [shape: f32[32,32], index: 3, kind: input, shape index: {}]
  %s4 = inlined_call_operand.vmem [shape: f32[32,1], index: 4, kind: input, shape index: {}]
  %s5 = inlined_call_operand.vmem [shape: f32[32,32], index: 5, kind: input, shape index: {}]
  %s6 = inlined_call_operand.vmem [shape: f32[32,1], index: 6, kind: input, shape index: {}]
  %s7 = inlined_call_operand.vmem [shape: f32[32,4], index: 7, kind: input, shape index: {}]
  %s8 = inlined_call_operand.vmem [shape: f32[1,4], index: 8, kind: input, shape index: {}]
  %s9 = inlined_call_operand.vmem [shape: f32[8,4], index: 9, kind: output, shape index: {}]
  %s10 = sld [smem:[#allocation0]]
  $region46: #{tpu_custom_call.1} parent=0
    _
  %s12 = ssub.s32 1, %s10
  %s13 = scalar_select 0, %s12, %s10
  // Predicated region
  $region2: #{tpu_custom_call.1} parent=0 // pred_check
    _
  $region3: #{tpu_custom_call.1} parent=0 // pred_check_branch
    %15 = sbr.rel (0) target = $region5
  $region4: #{tpu_custom_call.1} parent=0 // pred_region
    _
  $region5: #{tpu_custom_call.1} parent=0 // pred_fallthru
    _
  // Predicated region
  $region6: #{tpu_custom_call.1} parent=0 // pred_check
    _
  $region7: #{tpu_custom_call.1} parent=0 // pred_check_branch
    %17 = sbr.rel (0) target = $region9
  $region8: #{tpu_custom_call.1} parent=0 // pred_region
    _
  $region9: #{tpu_custom_call.1} parent=0 // pred_fallthru
    _
  // Predicated region
  $region10: #{tpu_custom_call.1} parent=0 // pred_check
    _
  $region11: #{tpu_custom_call.1} parent=0 // pred_check_branch
    %19 = sbr.rel (0) target = $region13
  $region12: #{tpu_custom_call.1} parent=0 // pred_region
    _
  $region13: #{tpu_custom_call.1} parent=0 // pred_fallthru
    _
  // Predicated region
  $region14: #{tpu_custom_call.1} parent=0 // pred_check
    _
  $region15: #{tpu_custom_call.1} parent=0 // pred_check_branch
    %21 = sbr.rel (0) target = $region17
  $region16: #{tpu_custom_call.1} parent=0 // pred_region
    _
  $region17: #{tpu_custom_call.1} parent=0 // pred_fallthru
    _
  // Predicated region
  $region18: #{tpu_custom_call.1} parent=0 // pred_check
    _
  $region19: #{tpu_custom_call.1} parent=0 // pred_check_branch
    %23 = sbr.rel (0) target = $region21
  $region20: #{tpu_custom_call.1} parent=0 // pred_region
    _
  $region21: #{tpu_custom_call.1} parent=0 // pred_fallthru
    _
  // Predicated region
  $region22: #{tpu_custom_call.1} parent=0 // pred_check
    _
  $region23: #{tpu_custom_call.1} parent=0 // pred_check_branch
    %25 = sbr.rel (0) target = $region25
  $region24: #{tpu_custom_call.1} parent=0 // pred_region
    _
  $region25: #{tpu_custom_call.1} parent=0 // pred_fallthru
    _
  // Predicated region
  $region26: #{tpu_custom_call.1} parent=0 // pred_check
    _
  $region27: #{tpu_custom_call.1} parent=0 // pred_check_branch
    %27 = sbr.rel (0) target = $region29
  $region28: #{tpu_custom_call.1} parent=0 // pred_region
    _
  $region29: #{tpu_custom_call.1} parent=0 // pred_fallthru
    _
  // Predicated region
  $region30: #{tpu_custom_call.1} parent=0 // pred_check
    _
  $region31: #{tpu_custom_call.1} parent=0 // pred_check_branch
    %29 = sbr.rel (0) target = $region33
  $region32: #{tpu_custom_call.1} parent=0 // pred_region
    _
  $region33: #{tpu_custom_call.1} parent=0 // pred_fallthru
    _
  // Predicated region
  $region34: #{tpu_custom_call.1} parent=0 // pred_check
    _
  $region35: #{tpu_custom_call.1} parent=0 // pred_check_branch
    %31 = sbr.rel (0) target = $region37
  $region36: #{tpu_custom_call.1} parent=0 // pred_region
    _
  $region37: #{tpu_custom_call.1} parent=0 // pred_fallthru
    _
  %v32 = vld [vmem:[%s0] sm:$0xff]
  %v33 = vld [vmem:[%s1] sm:$0xff]
  %v34 = vld [vmem:[%s1 + $0x8] sm:$0xff]
  %v35 = vld [vmem:[%s1 + $0x10] sm:$0xff]
  %v36 = vld [vmem:[%s1 + $0x18] sm:$0xff]
  %v37 = vld [vmem:[%s2] sm:$0xff]
  %v38 = vld [vmem:[%s2 + $0x8] sm:$0xff]
  %v39 = vld [vmem:[%s2 + $0x10] sm:$0xff]
  %v40 = vld [vmem:[%s2 + $0x18] sm:$0xff]
  %42 = vset.pattern.permute.xlu0 0
  %43 = vperm.xlu0 %42, %v37
  %v44 = vpop.permute.xlu0 %43
  %47 = vset.pattern.permute.xlu0 0
  %48 = vperm.xlu0 %47, %v38
  %v49 = vpop.permute.xlu0 %48
  %52 = vset.pattern.permute.xlu0 0
  %53 = vperm.xlu0 %52, %v39
  %v54 = vpop.permute.xlu0 %53
  %57 = vset.pattern.permute.xlu0 0
  %58 = vperm.xlu0 %57, %v40
  %v59 = vpop.permute.xlu0 %58
  %vm61 = vcmask 31744
  %v63 = vsel %vm61, %v33, 0
  %v66 = vsel %vm61, %v34, 0
  %v69 = vsel %vm61, %v35, 0
  %v72 = vsel %vm61, %v36, 0
  %v75 = vsel %vm61, %v32, 0
  %77 = vmatpush.xpose.msra.mxu0 0.0
  %78 = vmatpush.xpose.msra.mxu0 0.0
  %79 = vmatpush.xpose.msra.mxu0 0.0
  %80 = vmatpush.xpose.msra.mxu0 0.0
  %81 = vmatpush.xpose.msra.mxu0 0.0
  %82 = vmatpush.xpose.msra.mxu0 0.0
  %83 = vmatpush.xpose.msra.mxu0 0.0
  %84 = vmatpush.xpose.msra.mxu0 0.0
  %85 = vmatpush.xpose.msra.mxu0 0.0
  %86 = vmatpush.xpose.msra.mxu0 0.0
  %87 = vmatpush.xpose.msra.mxu0 0.0
  %88 = vmatpush.xpose.msra.mxu0 0.0
  %89 = vmatpush.xpose.msra.mxu0 0.0
  %90 = vmatpush.xpose.msra.mxu0 0.0
  %91 = vmatpush.xpose.msra.mxu0 0.0
  %92 = vmatpush.xpose.msra.mxu0 %v75
  %93 = vmatmul.f32.gmra.mxu0 %v63
  %v94 = vpop.f32.mrf.mxu0
  %v95 = vadd.f32 %v44, %v94
  %96 = vmatmul.f32.gmra.mxu0 %v66
  %v97 = vpop.f32.mrf.mxu0
  %v98 = vadd.f32 %v49, %v97
  %99 = vmatmul.f32.gmra.mxu0 %v69
  %v100 = vpop.f32.mrf.mxu0
  %v101 = vadd.f32 %v54, %v100
  %102 = vmatmul.f32.gmra.mxu0 %v72
  %v103 = vpop.f32.mrf.mxu0
  %v104 = vadd.f32 %v59, %v103
  %105 = vdwg.mxu0
  %v106 = vmax.f32 %v95, 0.0
  %v107 = vmax.f32 %v98, 0.0
  %v108 = vmax.f32 %v101, 0.0
  %v109 = vmax.f32 %v104, 0.0
  %v110 = vld [vmem:[%s3] sm:$0xff]
  %v111 = vld [vmem:[%s3 + $0x8] sm:$0xff]
  %v112 = vld [vmem:[%s3 + $0x10] sm:$0xff]
  %v113 = vld [vmem:[%s3 + $0x18] sm:$0xff]
  %v114 = vld [vmem:[%s4] sm:$0xff]
  %v115 = vld [vmem:[%s4 + $0x8] sm:$0xff]
  %v116 = vld [vmem:[%s4 + $0x10] sm:$0xff]
  %v117 = vld [vmem:[%s4 + $0x18] sm:$0xff]
  %119 = vset.pattern.permute.xlu0 0
  %120 = vperm.xlu0 %119, %v114
  %v121 = vpop.permute.xlu0 %120
  %124 = vset.pattern.permute.xlu0 0
  %125 = vperm.xlu0 %124, %v115
  %v126 = vpop.permute.xlu0 %125
  %129 = vset.pattern.permute.xlu0 0
  %130 = vperm.xlu0 %129, %v116
  %v131 = vpop.permute.xlu0 %130
  %134 = vset.pattern.permute.xlu0 0
  %135 = vperm.xlu0 %134, %v117
  %v136 = vpop.permute.xlu0 %135
  %vm138 = vcmask 261120
  %v140 = vsel %vm138, %v110, 0
  %v143 = vsel %vm138, %v111, 0
  %v146 = vsel %vm138, %v112, 0
  %v149 = vsel %vm138, %v113, 0
  %151 = vmatpush.msra.mxu0 0.0
  %152 = vmatpush.msra.mxu0 0.0
  %153 = vmatpush.msra.mxu0 0.0
  %154 = vmatpush.msra.mxu0 0.0
  %155 = vmatpush.msra.mxu0 0.0
  %156 = vmatpush.msra.mxu0 0.0
  %157 = vmatpush.msra.mxu0 0.0
  %158 = vmatpush.msra.mxu0 0.0
  %159 = vmatpush.msra.mxu0 0.0
  %160 = vmatpush.msra.mxu0 0.0
  %161 = vmatpush.msra.mxu0 0.0
  %162 = vmatpush.msra.mxu0 0.0
  %163 = vmatpush.msra.mxu0 %v109
  %164 = vmatpush.msra.mxu0 %v108
  %165 = vmatpush.msra.mxu0 %v107
  %166 = vmatpush.msra.mxu0 %v106
  %167 = vmatmul.f32.gmra.mxu0 %v140
  %v168 = vpop.f32.mrf.mxu0
  %v169 = vadd.f32 %v121, %v168
  %170 = vmatmul.f32.gmra.mxu0 %v143
  %v171 = vpop.f32.mrf.mxu0
  %v172 = vadd.f32 %v126, %v171
  %173 = vmatmul.f32.gmra.mxu0 %v146
  %v174 = vpop.f32.mrf.mxu0
  %v175 = vadd.f32 %v131, %v174
  %176 = vmatmul.f32.gmra.mxu0 %v149
  %v177 = vpop.f32.mrf.mxu0
  %v178 = vadd.f32 %v136, %v177
  %179 = vdwg.mxu0
  %v180 = vmax.f32 %v169, 0.0
  %v181 = vmax.f32 %v172, 0.0
  %v182 = vmax.f32 %v175, 0.0
  %v183 = vmax.f32 %v178, 0.0
  %v184 = vld [vmem:[%s5] sm:$0xff]
  %v185 = vld [vmem:[%s5 + $0x8] sm:$0xff]
  %v186 = vld [vmem:[%s5 + $0x10] sm:$0xff]
  %v187 = vld [vmem:[%s5 + $0x18] sm:$0xff]
  %v188 = vld [vmem:[%s6] sm:$0xff]
  %v189 = vld [vmem:[%s6 + $0x8] sm:$0xff]
  %v190 = vld [vmem:[%s6 + $0x10] sm:$0xff]
  %v191 = vld [vmem:[%s6 + $0x18] sm:$0xff]
  %193 = vset.pattern.permute.xlu0 0
  %194 = vperm.xlu0 %193, %v188
  %v195 = vpop.permute.xlu0 %194
  %198 = vset.pattern.permute.xlu0 0
  %199 = vperm.xlu0 %198, %v189
  %v200 = vpop.permute.xlu0 %199
  %203 = vset.pattern.permute.xlu0 0
  %204 = vperm.xlu0 %203, %v190
  %v205 = vpop.permute.xlu0 %204
  %208 = vset.pattern.permute.xlu0 0
  %209 = vperm.xlu0 %208, %v191
  %v210 = vpop.permute.xlu0 %209
  %v213 = vsel %vm138, %v184, 0
  %v216 = vsel %vm138, %v185, 0
  %v219 = vsel %vm138, %v186, 0
  %v222 = vsel %vm138, %v187, 0
  %224 = vmatpush.msra.mxu0 0.0
  %225 = vmatpush.msra.mxu0 0.0
  %226 = vmatpush.msra.mxu0 0.0
  %227 = vmatpush.msra.mxu0 0.0
  %228 = vmatpush.msra.mxu0 0.0
  %229 = vmatpush.msra.mxu0 0.0
  %230 = vmatpush.msra.mxu0 0.0
  %231 = vmatpush.msra.mxu0 0.0
  %232 = vmatpush.msra.mxu0 0.0
  %233 = vmatpush.msra.mxu0 0.0
  %234 = vmatpush.msra.mxu0 0.0
  %235 = vmatpush.msra.mxu0 0.0
  %236 = vmatpush.msra.mxu0 %v183
  %237 = vmatpush.msra.mxu0 %v182
  %238 = vmatpush.msra.mxu0 %v181
  %239 = vmatpush.msra.mxu0 %v180
  %240 = vmatmul.f32.gmra.mxu0 %v213
  %v241 = vpop.f32.mrf.mxu0
  %v242 = vadd.f32 %v195, %v241
  %243 = vmatmul.f32.gmra.mxu0 %v216
  %v244 = vpop.f32.mrf.mxu0
  %v245 = vadd.f32 %v200, %v244
  %246 = vmatmul.f32.gmra.mxu0 %v219
  %v247 = vpop.f32.mrf.mxu0
  %v248 = vadd.f32 %v205, %v247
  %249 = vmatmul.f32.gmra.mxu0 %v222
  %v250 = vpop.f32.mrf.mxu0
  %v251 = vadd.f32 %v210, %v250
  %252 = vdwg.mxu0
  %v253 = vmax.f32 %v242, 0.0
  %v254 = vmax.f32 %v245, 0.0
  %v255 = vmax.f32 %v248, 0.0
  %v256 = vmax.f32 %v251, 0.0
  %v257 = vld [vmem:[%s7] sm:$0xff]
  %v258 = vld [vmem:[%s7 + $0x8] sm:$0xff]
  %v259 = vld [vmem:[%s7 + $0x10] sm:$0xff]
  %v260 = vld [vmem:[%s7 + $0x18] sm:$0xff]
  %v261 = vld [vmem:[%s8] sm:$0x1]
  %v263 = vperm.slane %v261, 0
  %265 = vxpose.xlu0.b32.start [1/16] %v253, 128
  %266 = vxpose.xlu0.b32.cont [2/16] %v254, 128
  %267 = vxpose.xlu0.b32.cont [3/16] %v255, 128
  %268 = vxpose.xlu0.b32.cont [4/16] %v256, 128
  %269 = vxpose.xlu0.b32.cont [5/16] 0.0, 128
  %270 = vxpose.xlu0.b32.cont [6/16] 0.0, 128
  %271 = vxpose.xlu0.b32.cont [7/16] 0.0, 128
  %272 = vxpose.xlu0.b32.cont [8/16] 0.0, 128
  %273 = vxpose.xlu0.b32.cont [9/16] 0.0, 128
  %274 = vxpose.xlu0.b32.cont [10/16] 0.0, 128
  %275 = vxpose.xlu0.b32.cont [11/16] 0.0, 128
  %276 = vxpose.xlu0.b32.cont [12/16] 0.0, 128
  %277 = vxpose.xlu0.b32.cont [13/16] 0.0, 128
  %278 = vxpose.xlu0.b32.cont [14/16] 0.0, 128
  %279 = vxpose.xlu0.b32.cont [15/16] 0.0, 128
  %280 = vxpose.xlu0.b32.end [16/16] 0.0, 128
  %v281 = vpop.trf.xlu0
  %v282 = vpop.trf.xlu0
  %v283 = vpop.trf.xlu0
  %v284 = vpop.trf.xlu0
  %v285 = vpop.trf.xlu0
  %v286 = vpop.trf.xlu0
  %v287 = vpop.trf.xlu0
  %v288 = vpop.trf.xlu0
  %v289 = vpop.trf.xlu0
  %v290 = vpop.trf.xlu0
  %v291 = vpop.trf.xlu0
  %v292 = vpop.trf.xlu0
  %v293 = vpop.trf.xlu0
  %v294 = vpop.trf.xlu0
  %v295 = vpop.trf.xlu0
  %v296 = vpop.trf.xlu0
  %v298 = vsel %vm138, %v281, 0
  %300 = vmatpush.msra.mxu0 0.0
  %301 = vmatpush.msra.mxu0 0.0
  %302 = vmatpush.msra.mxu0 0.0
  %303 = vmatpush.msra.mxu0 0.0
  %304 = vmatpush.msra.mxu0 0.0
  %305 = vmatpush.msra.mxu0 0.0
  %306 = vmatpush.msra.mxu0 0.0
  %307 = vmatpush.msra.mxu0 0.0
  %308 = vmatpush.msra.mxu0 0.0
  %309 = vmatpush.msra.mxu0 0.0
  %310 = vmatpush.msra.mxu0 0.0
  %311 = vmatpush.msra.mxu0 0.0
  %312 = vmatpush.msra.mxu0 %v260
  %313 = vmatpush.msra.mxu0 %v259
  %314 = vmatpush.msra.mxu0 %v258
  %315 = vmatpush.msra.mxu0 %v257
  %316 = vmatmul.f32.gmra.mxu0 %v298
  %v317 = vpop.f32.mrf.mxu0
  %v318 = vadd.f32 %v263, %v317
  %319 = vdwg.mxu0
  %320 = vst.msk [vmem:[%s9] sm:$0xff] %vm61, %v318
  // Predicated region
  $region38: #{tpu_custom_call.1} parent=0 // pred_check
    _
  $region39: #{tpu_custom_call.1} parent=0 // pred_check_branch
    %322 = sbr.rel (0) target = $region41
  $region40: #{tpu_custom_call.1} parent=0 // pred_region
    _
  $region41: #{tpu_custom_call.1} parent=0 // pred_fallthru
    _
  // Predicated region
  $region42: #{tpu_custom_call.1} parent=0 // pred_check
    _
  $region43: #{tpu_custom_call.1} parent=0 // pred_check_branch
    %324 = sbr.rel (0) target = $region45
  $region44: #{tpu_custom_call.1} parent=0 // pred_region
    _
  $region45: #{tpu_custom_call.1} parent=0 // pred_fallthru
    _

</llo_original>
